<compile_context>
chip_gen: v7x
topology: tpu7x:2x2x1
jax: 0.10.0
libtpu: 0.0.40
codegen_flags: <defaults>
</compile_context>

<pallas_src>
import math
import functools

import jax
import jax.numpy as jnp
from jax.experimental import pallas as pl
from jax.experimental.pallas import tpu as pltpu


# ----------------------------------------------------------------------------
# helpers / generation-aware budgets
# ----------------------------------------------------------------------------
def _round_up(x: int, m: int) -> int:
    return ((x + m - 1) // m) * m


def _vmem_capacity_bytes() -> int:
    try:
        cap = int(pltpu.get_tpu_info().vmem_capacity_bytes)
        if cap > 0:
            return cap
    except Exception:
        pass
    return 64 * 1024 * 1024  # conservative fallback: assume v7x (64 MiB / TC)


_VMEM_CAP = _vmem_capacity_bytes()
_VMEM_BUDGET = (_VMEM_CAP * 3) // 4          # leave headroom for Mosaic scratch
_BIG_VMEM = _VMEM_CAP >= (100 << 20)         # v5e/v6e (128 MiB) vs v7x (64 MiB)

# tiled-path tile targets (review: bigger on 128-MiB chips, moderate on v7x)
if _BIG_VMEM:
    _TILED_TM, _TILED_TN, _TILED_TK = 512, 1024, 512
    _FUSED_TM = 512
else:
    _TILED_TM, _TILED_TN, _TILED_TK = 256, 512, 512
    _FUSED_TM = 256


def _vmem_request(bytes_needed: int) -> int:
    return int(min(max(bytes_needed, 32 << 20), _VMEM_BUDGET))


def _pick_tile(padded_dim: int, target: int) -> int:
    """Largest multiple of 128 that divides padded_dim and is <= target."""
    t = min(target, padded_dim)
    t = max((t // 128) * 128, 128)
    while padded_dim % t != 0:
        t -= 128
    return t


# ----------------------------------------------------------------------------
# single-buffered resident blocks (probe once; fall back gracefully)
# ----------------------------------------------------------------------------
def _probe_single_buffer() -> bool:
    if not hasattr(pl, "Buffered"):
        return False
    try:
        def k(a_ref, w_ref, o_ref):
            o_ref[...] = a_ref[...] + w_ref[...]

        a = jnp.zeros((8, 128), jnp.float32)
        w = jnp.ones((8, 128), jnp.float32)
        out = pl.pallas_call(
            k,
            out_shape=jax.ShapeDtypeStruct((8, 128), jnp.float32),
            grid=(1,),
            in_specs=[pl.BlockSpec((8, 128), lambda i: (0, 0)),
                      pl.BlockSpec((8, 128), lambda i: (0, 0),
                                   pipeline_mode=pl.Buffered(1))],
            out_specs=pl.BlockSpec((8, 128), lambda i: (0, 0)),
        )(a, w)
        jax.block_until_ready(out)
        return True
    except Exception:
        return False


_SINGLE_BUFFER_WEIGHTS = _probe_single_buffer()
_WEIGHT_BUFFERS = 1 if _SINGLE_BUFFER_WEIGHTS else 2


def _resident_spec(shape):
    """BlockSpec for a block whose index never changes across the grid."""
    idx = lambda i: (0, 0)
    if _SINGLE_BUFFER_WEIGHTS:
        return pl.BlockSpec(shape, idx, pipeline_mode=pl.Buffered(1))
    return pl.BlockSpec(shape, idx)


# ----------------------------------------------------------------------------
# fused whole-MLP kernel (one pallas_call; activation never leaves VMEM/vregs)
# ----------------------------------------------------------------------------
def _make_fused_kernel(n_layers):
    def kernel(*refs):
        x_ref = refs[0]
        o_ref = refs[1 + 2 * n_layers]
        h = x_ref[...]
        for i in range(n_layers):
            w_ref = refs[1 + 2 * i]
            b_ref = refs[2 + 2 * i]
            # MXU matmul in the weight's native dtype, f32 accumulation.
            y = jnp.dot(h.astype(w_ref.dtype), w_ref[...],
                        preferred_element_type=jnp.float32)
            y = y + b_ref[...]                      # bias pre-cast to f32
            if i < n_layers - 1:
                h = jnp.tanh(y)                     # EUP, stays on-chip
            else:
                o_ref[...] = y.astype(o_ref.dtype)
    return kernel


# ----------------------------------------------------------------------------
# tiled single-layer fallback (weights too large to keep resident)
# ----------------------------------------------------------------------------
def _linear_tiled_kernel(x_ref, w_ref, b_ref, o_ref, acc_ref, *, apply_tanh):
    k = pl.program_id(2)

    @pl.when(k == 0)
    def _():
        acc_ref[...] = jnp.zeros_like(acc_ref)

    acc_ref[...] += jnp.dot(x_ref[...].astype(w_ref.dtype), w_ref[...],
                            preferred_element_type=jnp.float32)

    @pl.when(k == pl.num_programs(2) - 1)
    def _():
        y = acc_ref[...] + b_ref[...]               # bias already f32
        if apply_tanh:
            y = jnp.tanh(y)
        o_ref[...] = y.astype(o_ref.dtype)


def _pallas_linear_tiled_padded(x_p, w_p, b_p, *, out_dtype, apply_tanh,
                                tm, tn, tk):
    """y = x_p @ w_p + b_p on already-padded operands; emits padded output.

    x_p:(Mp,Kp)  w_p:(Kp,Np)  b_p:(1,Np) f32.  Mp%tm==0, Kp%tk==0, Np%tn==0.
    """
    Mp, Kp = x_p.shape
    _, Np = w_p.shape

    in_bytes = 2 * (tm * tk * x_p.dtype.itemsize
                    + tk * tn * w_p.dtype.itemsize
                    + tn * b_p.dtype.itemsize)
    out_bytes = 2 * tm * tn * jnp.dtype(out_dtype).itemsize
    needed = in_bytes + out_bytes + tm * tn * 4 + (4 << 20)

    kernel = functools.partial(_linear_tiled_kernel, apply_tanh=apply_tanh)
    return pl.pallas_call(
        kernel,
        out_shape=jax.ShapeDtypeStruct((Mp, Np), out_dtype),
        grid=(Mp // tm, Np // tn, Kp // tk),
        in_specs=[
            pl.BlockSpec((tm, tk), lambda i, j, k: (i, k)),
            pl.BlockSpec((tk, tn), lambda i, j, k: (k, j)),
            pl.BlockSpec((1, tn), lambda i, j, k: (0, j)),
        ],
        out_specs=pl.BlockSpec((tm, tn), lambda i, j, k: (i, j)),
        scratch_shapes=[pltpu.VMEM((tm, tn), jnp.float32)],
        compiler_params=pltpu.CompilerParams(
            dimension_semantics=("parallel", "parallel", "arbitrary"),
            vmem_limit_bytes=_vmem_request(needed)),
    )(x_p, w_p, b_p)


# ----------------------------------------------------------------------------
# MLP module (JAX/Pallas equivalent of clipcap.MLP(sizes, bias=True, act=Tanh))
# ----------------------------------------------------------------------------
class MLP:
    def __init__(self, sizes, key, param_dtype=jnp.bfloat16,
                 force_tiled=False, tiles=None):
        self.sizes = tuple(int(s) for s in sizes)
        self.param_dtype = jnp.dtype(param_dtype)
        self.divider = math.sqrt(self.sizes[-1] / self.sizes[0])
        self.force_tiled = force_tiled
        self.tiles = dict(tiles or {})

        # PyTorch nn.Linear default init (f32 master copies), W stored (in,out).
        self.raw_params = []
        for i in range(len(self.sizes) - 1):
            fan_in, fan_out = self.sizes[i], self.sizes[i + 1]
            key, kw, kb = jax.random.split(key, 3)
            bound = 1.0 / math.sqrt(fan_in)
            w = jax.random.uniform(kw, (fan_in, fan_out), jnp.float32,
                                   -bound, bound)
            b = jax.random.uniform(kb, (fan_out,), jnp.float32, -bound, bound)
            self.raw_params.append((w, b))

        # Pre-pad ONCE (lane-dense 128 multiples); fold 1/divider into the
        # first-layer weight (x/d @ W == x @ (W/d) up to f32 rounding);
        # weights in param_dtype (bf16 by default), biases kept in f32.
        # Zero padding is exact: padded weight rows/cols and bias entries are
        # zero and tanh(0)=0, so padding never leaks into real outputs.
        self.dims_pad = [_round_up(d, 128) for d in self.sizes]
        self.padded_params = []
        for i, (w, b) in enumerate(self.raw_params):
            if i == 0:
                w = w / self.divider
            dip, dop = self.dims_pad[i], self.dims_pad[i + 1]
            wp = jnp.zeros((dip, dop), self.param_dtype)
            wp = wp.at[:w.shape[0], :w.shape[1]].set(w.astype(self.param_dtype))
            bp = jnp.zeros((1, dop), jnp.float32).at[0, :b.shape[0]].set(b)
            self.padded_params.append((wp, bp))

        self.fused_param_bytes = sum(
            int(w.size) * w.dtype.itemsize + int(b.size) * b.dtype.itemsize
            for w, b in self.padded_params)

    # ------------------------------ forward ----------------------------------
    def __call__(self, x):
        lead, din = x.shape[:-1], x.shape[-1]
        x2 = x.reshape((-1, din))
        y2 = self._forward_2d(x2)
        return y2.reshape(lead + (self.sizes[-1],))

    def _forward_2d(self, x):
        if self.force_tiled:
            return self._forward_tiled(x)
        B = x.shape[0]
        tm = min(_FUSED_TM, _round_up(B, 8))
        if B >= 16 and _round_up(B, tm) == tm:
            tm = _round_up((B + 1) // 2, 8)      # >=2 batch steps (v7x: 2 TCs)
        itemsize = x.dtype.itemsize
        while tm > 8 and self._fused_vmem_estimate(tm, itemsize) > _VMEM_BUDGET:
            tm = max(8, _round_up(tm // 2, 8))
        if self._fused_vmem_estimate(tm, itemsize) <= _VMEM_BUDGET:
            return self._forward_fused(x, tm)
        return self._forward_tiled(x)

    def _fused_vmem_estimate(self, tm, io_itemsize):
        w_bytes = _WEIGHT_BUFFERS * self.fused_param_bytes
        io_bytes = 2 * tm * (self.dims_pad[0] + self.dims_pad[-1]) * io_itemsize
        # f32 intermediate activation + its cast-to-param-dtype matmul input
        act_bytes = sum(tm * d * (4 + self.param_dtype.itemsize)
                        for d in self.dims_pad[1:])
        return w_bytes + io_bytes + act_bytes + (4 << 20)

    def _forward_fused(self, x, tm):
        B = x.shape[0]
        d0p, dlp = self.dims_pad[0], self.dims_pad[-1]
        Bp = _round_up(B, tm)
        x_p = jnp.zeros((Bp, d0p), x.dtype).at[:B, :self.sizes[0]].set(x)

        n_layers = len(self.padded_params)
        in_specs = [pl.BlockSpec((tm, d0p), lambda i: (i, 0))]
        args = [x_p]
        for w, b in self.padded_params:
            in_specs.append(_resident_spec(w.shape))   # resident, 1x buffered
            in_specs.append(_resident_spec(b.shape))
            args += [w, b]

        needed = self._fused_vmem_estimate(tm, x.dtype.itemsize)
        out = pl.pallas_call(
            _make_fused_kernel(n_layers),
            out_shape=jax.ShapeDtypeStruct((Bp, dlp), x.dtype),
            grid=(Bp // tm,),
            in_specs=in_specs,
            out_specs=pl.BlockSpec((tm, dlp), lambda i: (i, 0)),
            compiler_params=pltpu.CompilerParams(
                dimension_semantics=("parallel",),
                vmem_limit_bytes=_vmem_request(needed)),
        )(*args)
        return out[:B, :self.sizes[-1]]

    def _forward_tiled(self, x):
        """Per-layer tiled matmuls; activations stay padded across layers."""
        B = x.shape[0]
        tm = self.tiles.get("tm")
        if tm is None:
            tm = min(_TILED_TM, _round_up(B, 8))
            if B >= 16 and _round_up(B, tm) == tm:
                tm = _round_up((B + 1) // 2, 8)
        else:
            tm = max(8, _round_up(int(tm), 8))
        Mp = _round_up(B, tm)

        # pad the activation ONCE; slice ONCE at the end.
        h = jnp.zeros((Mp, self.dims_pad[0]), x.dtype)
        h = h.at[:B, :self.sizes[0]].set(x)

        n_layers = len(self.padded_params)
        for i, (w_p, b_p) in enumerate(self.padded_params):
            Kp, Np = w_p.shape
            tn = _pick_tile(Np, int(self.tiles.get("tn", _TILED_TN)))
            tk = _pick_tile(Kp, int(self.tiles.get("tk", _TILED_TK)))
            last = (i == n_layers - 1)
            out_dtype = x.dtype if last else self.param_dtype
            h = _pallas_linear_tiled_padded(h, w_p, b_p, out_dtype=out_dtype,
                                            apply_tanh=not last,
                                            tm=tm, tn=tn, tk=tk)
        return h[:B, :self.sizes[-1]]

    # -------------------------- plain-JAX reference --------------------------
    def reference(self, x):
        """Matches PyTorch forward semantics (divide, then f32 layers)."""
        x = x.astype(jnp.float32) / self.divider
        n_layers = len(self.raw_params)
        for i, (w, b) in enumerate(self.raw_params):
            x = x @ w + b
            if i < n_layers - 1:
                x = jnp.tanh(x)
        return x


# ----------------------------------------------------------------------------
# demo / self-check
# ----------------------------------------------------------------------------
if __name__ == "__main__":
    key = jax.random.PRNGKey(0)
    k1, k2, k3, k4 = jax.random.split(key, 4)

    # 1) Small clipcap-style MLP, fused single-kernel path, f32 params:
    #    tight tolerance vs. the PyTorch-semantics reference.
    sizes = (32, 64, 128)
    batch = 8
    x = jax.random.normal(k1, (batch, sizes[0]), jnp.float32)
    mlp_f32 = MLP(sizes, k2, param_dtype=jnp.float32)
    out = jax.block_until_ready(mlp_f32(x))
    ref = mlp_f32.reference(x)
    assert out.shape == (batch, sizes[-1])
    assert jnp.allclose(out, ref, atol=1e-4, rtol=1e-4), "fused f32 mismatch"

    # 2) Same weights, default bf16 params (bandwidth-optimized path):
    #    looser tolerance against the f32 reference.
    mlp_bf16 = MLP(sizes, k2)                 # same key -> same master weights
    out_bf = jax.block_until_ready(mlp_bf16(x))
    assert out_bf.shape == (batch, sizes[-1])
    assert jnp.allclose(out_bf, ref, atol=3e-2, rtol=3e-2), "fused bf16 mismatch"

    # 3) Tiled fallback (K-accumulation grid, pl.when init/finalize, padded
    #    activations carried across layers), forced small tiles so every grid
    #    axis has >1 step.
    sizes2 = (384, 256, 320)
    batch2 = 96
    x2 = jax.random.normal(k3, (batch2, sizes2[0]), jnp.float32)
    mlp2 = MLP(sizes2, k4, param_dtype=jnp.float32, force_tiled=True,
               tiles=dict(tm=64, tn=128, tk=128))
    out2 = jax.block_until_ready(mlp2(x2))
    ref2 = mlp2.reference(x2)
    assert out2.shape == (batch2, sizes2[-1])
    assert jnp.allclose(out2, ref2, atol=1e-4, rtol=1e-4), "tiled path mismatch"

    print("KERNEL_OK")
</pallas_src>

<mosaic_0001>
module attributes {stable_mosaic.version = 11 : i64} {
  func.func @k(%arg0: i32, %arg1: memref<8x128xf32, #tpu.memory_space<vmem>>, %arg2: memref<8x128xf32, #tpu.memory_space<vmem>>, %arg3: memref<8x128xf32, #tpu.memory_space<vmem>>) attributes {dimension_semantics = [#tpu.dimension_semantics<arbitrary>], iteration_bounds = array<i64: 1>, scalar_prefetch = 0 : i64, scratch_operands = 0 : i64, tpu.core_type = #tpu.core_type<tc>, window_params = [{pipeline_mode = #tpu.pipeline_mode<synchronous>, transform_indices = @transform_0, window_bounds = array<i64: 8, 128>}, {pipeline_mode = #tpu.pipeline_mode<synchronous>, transform_indices = @transform_1, window_bounds = array<i64: 8, 128>}, {pipeline_mode = #tpu.pipeline_mode<synchronous>, transform_indices = @transform_2, window_bounds = array<i64: 8, 128>}]} {
    %c0 = arith.constant 0 : index
    %c0_0 = arith.constant 0 : index
    %0 = vector.load %arg1[%c0, %c0_0] : memref<8x128xf32, #tpu.memory_space<vmem>>, vector<8x128xf32>
    %c0_1 = arith.constant 0 : index
    %c0_2 = arith.constant 0 : index
    %1 = vector.load %arg2[%c0_1, %c0_2] : memref<8x128xf32, #tpu.memory_space<vmem>>, vector<8x128xf32>
    %2 = arith.addf %0, %1 : vector<8x128xf32>
    %c0_3 = arith.constant 0 : index
    %c0_4 = arith.constant 0 : index
    %3 = vector.load %arg3[%c0_3, %c0_4] : memref<8x128xf32, #tpu.memory_space<vmem>>, vector<8x128xf32>
    tpu.vector_store %arg3[%c0_3, %c0_4], %2 {strides = array<i32>} : memref<8x128xf32, #tpu.memory_space<vmem>>, vector<8x128xf32>,
    return
  }
  func.func @transform_0(%arg0: i32) -> (i32, i32) {
    %c0_i32 = arith.constant 0 : i32
    %c0_i32_0 = arith.constant 0 : i32
    %c0_i32_1 = arith.constant 0 : i32
    return %c0_i32, %c0_i32_0 : i32, i32
  }
  func.func @transform_1(%arg0: i32) -> (i32, i32) {
    %c0_i32 = arith.constant 0 : i32
    %c0_i32_0 = arith.constant 0 : i32
    %c0_i32_1 = arith.constant 0 : i32
    return %c0_i32, %c0_i32_0 : i32, i32
  }
  func.func @transform_2(%arg0: i32) -> (i32, i32) {
    %c0_i32 = arith.constant 0 : i32
    %c0_i32_0 = arith.constant 0 : i32
    %c0_i32_1 = arith.constant 0 : i32
    return %c0_i32, %c0_i32_0 : i32, i32
  }
}

module attributes {stable_mosaic.version = 11 : i64} {
  func.func @kernel(%arg0: i32, %arg1: memref<8x128xf32, #tpu.memory_space<vmem>>, %arg2: memref<128x128xf32, #tpu.memory_space<vmem>>, %arg3: memref<1x128xf32, #tpu.memory_space<vmem>>, %arg4: memref<128x128xf32, #tpu.memory_space<vmem>>, %arg5: memref<1x128xf32, #tpu.memory_space<vmem>>, %arg6: memref<8x128xf32, #tpu.memory_space<vmem>>) attributes {dimension_semantics = [#tpu.dimension_semantics<parallel>], iteration_bounds = array<i64: 1>, scalar_prefetch = 0 : i64, scratch_operands = 0 : i64, tpu.core_type = #tpu.core_type<tc>, window_params = [{transform_indices = @transform_0, window_bounds = array<i64: 8, 128>}, {pipeline_mode = #tpu.pipeline_mode<synchronous>, transform_indices = @transform_1, window_bounds = array<i64: 128, 128>}, {pipeline_mode = #tpu.pipeline_mode<synchronous>, transform_indices = @transform_2, window_bounds = array<i64: 1, 128>}, {pipeline_mode = #tpu.pipeline_mode<synchronous>, transform_indices = @transform_3, window_bounds = array<i64: 128, 128>}, {pipeline_mode = #tpu.pipeline_mode<synchronous>, transform_indices = @transform_4, window_bounds = array<i64: 1, 128>}, {transform_indices = @transform_5, window_bounds = array<i64: 8, 128>}]} {
    %c0 = arith.constant 0 : index
    %c0_0 = arith.constant 0 : index
    %0 = vector.load %arg1[%c0, %c0_0] : memref<8x128xf32, #tpu.memory_space<vmem>>, vector<8x128xf32>
    %c0_1 = arith.constant 0 : index
    %c0_2 = arith.constant 0 : index
    %1 = vector.load %arg2[%c0_1, %c0_2] : memref<128x128xf32, #tpu.memory_space<vmem>>, vector<128x128xf32>
    %cst = arith.constant dense<0.000000e+00> : vector<8x128xf32>
    %2 = tpu.matmul %0, %1, %cst {dimension_numbers = #tpu.dot_dimension_numbers<[1], [0], [0], [1], [0, 0, 1, 1], [], []>} : vector<8x128xf32>, vector<128x128xf32>, vector<8x128xf32> -> vector<8x128xf32>
    %c0_3 = arith.constant 0 : index
    %c0_4 = arith.constant 0 : index
    %3 = vector.load %arg3[%c0_3, %c0_4] : memref<1x128xf32, #tpu.memory_space<vmem>>, vector<1x128xf32>
    %4 = vector.broadcast %3 : vector<1x128xf32> to vector<8x128xf32>
    %5 = arith.addf %2, %4 : vector<8x128xf32>
    %6 = math.tanh %5 : vector<8x128xf32>
    %c0_5 = arith.constant 0 : index
    %c0_6 = arith.constant 0 : index
    %7 = vector.load %arg4[%c0_5, %c0_6] : memref<128x128xf32, #tpu.memory_space<vmem>>, vector<128x128xf32>
    %cst_7 = arith.constant dense<0.000000e+00> : vector<8x128xf32>
    %8 = tpu.matmul %6, %7, %cst_7 {dimension_numbers = #tpu.dot_dimension_numbers<[1], [0], [0], [1], [0, 0, 1, 1], [], []>} : vector<8x128xf32>, vector<128x128xf32>, vector<8x128xf32> -> vector<8x128xf32>
    %c0_8 = arith.constant 0 : index
    %c0_9 = arith.constant 0 : index
    %9 = vector.load %arg5[%c0_8, %c0_9] : memref<1x128xf32, #tpu.memory_space<vmem>>, vector<1x128xf32>
    %10 = vector.broadcast %9 : vector<1x128xf32> to vector<8x128xf32>
    %11 = arith.addf %8, %10 : vector<8x128xf32>
    %c0_10 = arith.constant 0 : index
    %c0_11 = arith.constant 0 : index
    %12 = vector.load %arg6[%c0_10, %c0_11] : memref<8x128xf32, #tpu.memory_space<vmem>>, vector<8x128xf32>
    tpu.vector_store %arg6[%c0_10, %c0_11], %11 {strides = array<i32>} : memref<8x128xf32, #tpu.memory_space<vmem>>, vector<8x128xf32>,
    return
  }
  func.func @transform_0(%arg0: i32) -> (i32, i32) {
    %c0_i32 = arith.constant 0 : i32
    %c0_i32_0 = arith.constant 0 : i32
    return %arg0, %c0_i32 : i32, i32
  }
  func.func @transform_1(%arg0: i32) -> (i32, i32) {
    %c0_i32 = arith.constant 0 : i32
    %c0_i32_0 = arith.constant 0 : i32
    %c0_i32_1 = arith.constant 0 : i32
    return %c0_i32, %c0_i32_0 : i32, i32
  }
  func.func @transform_2(%arg0: i32) -> (i32, i32) {
    %c0_i32 = arith.constant 0 : i32
    %c0_i32_0 = arith.constant 0 : i32
    %c0_i32_1 = arith.constant 0 : i32
    return %c0_i32, %c0_i32_0 : i32, i32
  }
  func.func @transform_3(%arg0: i32) -> (i32, i32) {
    %c0_i32 = arith.constant 0 : i32
    %c0_i32_0 = arith.constant 0 : i32
    %c0_i32_1 = arith.constant 0 : i32
    return %c0_i32, %c0_i32_0 : i32, i32
  }
  func.func @transform_4(%arg0: i32) -> (i32, i32) {
    %c0_i32 = arith.constant 0 : i32
    %c0_i32_0 = arith.constant 0 : i32
    %c0_i32_1 = arith.constant 0 : i32
    return %c0_i32, %c0_i32_0 : i32, i32
  }
  func.func @transform_5(%arg0: i32) -> (i32, i32) {
    %c0_i32 = arith.constant 0 : i32
    %c0_i32_0 = arith.constant 0 : i32
    return %arg0, %c0_i32 : i32, i32
  }
}

</mosaic_0001>

<llo_original>
// kernel: tpu_custom_call.1
$region0: #{tpu_custom_call.1}
  #allocation0 [shape = 'u32[]', space=smem, size = 0x4, offset = 0x4, fixed_abs, tag = 'smem constant byte address 0x4 - core index']
  #allocation1 [shape = 'u32[144,128]{1,0:T(1,128)}', space=vmem, size = 0x12000, scoped, tag = 'internal scratch']
  %s0 = inlined_call_operand.hbm [shape: f32[8,128], index: 0, kind: input, shape index: {}]
  %s1 = inlined_call_operand.hbm [shape: f32[8,128], index: 1, kind: input, shape index: {}]
  %s2 = inlined_call_operand.hbm [shape: f32[8,128], index: 2, kind: output, shape index: {}]
  %s3 = sld [smem:[#allocation0]]
  $region26: #{tpu_custom_call.1} parent=0
    _
  %s5 = ssub.s32 1, %s3
  %s6 = scalar_select 0, %s5, %s3
  $region1: #{tpu_custom_call.1} parent=0
    #allocation2 [shape = 'u8[4096]{0}', space=vmem, size = 0x1000, scoped, tag = 'input window, operand 0, single buffered']
    #allocation3 [shape = 's32[1]{0}', space=sflag, size = 0x4, scoped, tag = 'scoped memory for tpu_custom_call.1']
    #allocation4 [shape = 's32[1]{0}', space=sflag, size = 0x4, scoped, tag = 'scoped memory for tpu_custom_call.1']
    #allocation5 [shape = 'u8[4096]{0}', space=vmem, size = 0x1000, scoped, tag = 'input window, operand 1, single buffered']
    #allocation6 [shape = 's32[1]{0}', space=sflag, size = 0x4, scoped, tag = 'scoped memory for tpu_custom_call.1']
    #allocation7 [shape = 'u8[4096]{0}', space=vmem, size = 0x1000, scoped, tag = 'output window, operand 0, single buffered']
    %7 = vsyncpa [#allocation3], 0
    %8 = vsyncpa [#allocation6], 0
    %9 = vsyncpa [#allocation4], 0
    // Predicated region
    $region2: #{tpu_custom_call.1} parent=1 // pred_check
      _
    $region3: #{tpu_custom_call.1} parent=1 // pred_check_branch
      %11 = sbr.rel (0) target = $region5
    $region4: #{tpu_custom_call.1} parent=1 // pred_region
      %s13 = ssub.s32 128, 128
      %14 = vsyncadd [#allocation3], %s13
      %s16 = sshll.u32 [#allocation2], 4
      %s17 = int_to_ptr.vmem [resolvable:$true] %s16
      %19 = dma.hbm_to_vmem [thread:$0]  %s0, 128, %s17, [#allocation3]
    $region5: #{tpu_custom_call.1} parent=1 // pred_fallthru
      _
    // Predicated region
    $region6: #{tpu_custom_call.1} parent=1 // pred_check
      _
    $region7: #{tpu_custom_call.1} parent=1 // pred_check_branch
      %21 = sbr.rel (0) target = $region9
    $region8: #{tpu_custom_call.1} parent=1 // pred_region
      %s23 = ssub.s32 128, 128
      %24 = vsyncadd [#allocation6], %s23
      %s26 = sshll.u32 [#allocation5], 4
      %s27 = int_to_ptr.vmem [resolvable:$true] %s26
      %29 = dma.hbm_to_vmem [thread:$0]  %s1, 128, %s27, [#allocation6]
    $region9: #{tpu_custom_call.1} parent=1 // pred_fallthru
      _
    // Predicated region
    $region10: #{tpu_custom_call.1} parent=1 // pred_check
      _
    $region11: #{tpu_custom_call.1} parent=1 // pred_check_branch
      %31 = sbr.rel (0) target = $region13
    $region12: #{tpu_custom_call.1} parent=1 // pred_region
      %32 = dma.done [#allocation3], 128
    $region13: #{tpu_custom_call.1} parent=1 // pred_fallthru
      _
    // Predicated region
    $region14: #{tpu_custom_call.1} parent=1 // pred_check
      _
    $region15: #{tpu_custom_call.1} parent=1 // pred_check_branch
      %34 = sbr.rel (0) target = $region17
    $region16: #{tpu_custom_call.1} parent=1 // pred_region
      %35 = dma.done [#allocation6], 128
    $region17: #{tpu_custom_call.1} parent=1 // pred_fallthru
      _
    %v36 = vld [vmem:[#allocation2] sm:$0xff]
    %v37 = vld [vmem:[#allocation5] sm:$0xff]
    %v38 = vadd.f32 %v36, %v37
    %39 = vst [vmem:[#allocation7] sm:$0xff] %v38
    // Predicated region
    $region18: #{tpu_custom_call.1} parent=1 // pred_check
      _
    $region19: #{tpu_custom_call.1} parent=1 // pred_check_branch
      %41 = sbr.rel (0) target = $region21
    $region20: #{tpu_custom_call.1} parent=1 // pred_region
      %s43 = ssub.s32 128, 128
      %44 = vsyncadd [#allocation4], %s43
      %s46 = sshll.u32 [#allocation7], 4
      %s47 = int_to_ptr.vmem [resolvable:$true] %s46
      %49 = dma.vmem_to_hbm [thread:$0]  %s47, 128, %s2, [#allocation4]
    $region21: #{tpu_custom_call.1} parent=1 // pred_fallthru
      _
    // Predicated region
    $region22: #{tpu_custom_call.1} parent=1 // pred_check
      _
    $region23: #{tpu_custom_call.1} parent=1 // pred_check_branch
      %51 = sbr.rel (0) target = $region25
    $region24: #{tpu_custom_call.1} parent=1 // pred_region
      %52 = dma.done [#allocation4], 128
    $region25: #{tpu_custom_call.1} parent=1 // pred_fallthru
      _
    %53 = vsyncpa [#allocation3], 1
    %54 = vsyncpa [#allocation6], 1
    %55 = vsyncpa [#allocation4], 1

// kernel: tpu_custom_call.1
$region0: #{tpu_custom_call.1}
  #allocation0 [shape = 'u32[]', space=smem, size = 0x4, offset = 0x4, fixed_abs, tag = 'smem constant byte address 0x4 - core index']
  #allocation1 [shape = 'u32[144,128]{1,0:T(1,128)}', space=vmem, size = 0x12000, scoped, tag = 'internal scratch']
  %s0 = inlined_call_operand.hbm [shape: f32[8,128], index: 0, kind: input, shape index: {}]
  %s1 = inlined_call_operand.hbm [shape: f32[128,128], index: 1, kind: input, shape index: {}]
  %s2 = inlined_call_operand.vmem [shape: f32[1,128], index: 2, kind: input, shape index: {}]
  %s3 = inlined_call_operand.hbm [shape: f32[128,128], index: 3, kind: input, shape index: {}]
  %s4 = inlined_call_operand.vmem [shape: f32[1,128], index: 4, kind: input, shape index: {}]
  %s5 = inlined_call_operand.hbm [shape: f32[8,128], index: 5, kind: output, shape index: {}]
  %s6 = sld [smem:[#allocation0]]
  $region42: #{tpu_custom_call.1} parent=0
    _
  %s8 = ssub.s32 1, %s6
  %s9 = scalar_select 0, %s8, %s6
  $region1: #{tpu_custom_call.1} parent=0
    #allocation2 [shape = 'u8[4096]{0}', space=vmem, size = 0x1000, scoped, tag = 'input window, operand 0, single buffered']
    #allocation3 [shape = 's32[1]{0}', space=sflag, size = 0x4, scoped, tag = 'scoped memory for tpu_custom_call.1']
    #allocation4 [shape = 's32[1]{0}', space=sflag, size = 0x4, scoped, tag = 'scoped memory for tpu_custom_call.1']
    #allocation5 [shape = 'u8[65536]{0}', space=vmem, size = 0x10000, scoped, tag = 'input window, operand 1, single buffered']
    #allocation6 [shape = 's32[1]{0}', space=sflag, size = 0x4, scoped, tag = 'scoped memory for tpu_custom_call.1']
    #allocation7 [shape = 'u8[65536]{0}', space=vmem, size = 0x10000, scoped, tag = 'input window, operand 3, single buffered']
    #allocation8 [shape = 'u8[4096]{0}', space=vmem, size = 0x1000, scoped, tag = 'output window, operand 0, single buffered']
    %10 = vsyncpa [#allocation3], 0
    %11 = vsyncpa [#allocation6], 0
    %12 = vsyncpa [#allocation4], 0
    // Predicated region
    $region2: #{tpu_custom_call.1} parent=1 // pred_check
      _
    $region3: #{tpu_custom_call.1} parent=1 // pred_check_branch
      %14 = sbr.rel (0) target = $region5
    $region4: #{tpu_custom_call.1} parent=1 // pred_region
      %s16 = ssub.s32 128, 128
      %17 = vsyncadd [#allocation3], %s16
      %s19 = sshll.u32 [#allocation2], 4
      %s20 = int_to_ptr.vmem [resolvable:$true] %s19
      %22 = dma.hbm_to_vmem [thread:$0]  %s0, 128, %s20, [#allocation3]
    $region5: #{tpu_custom_call.1} parent=1 // pred_fallthru
      _
    // Predicated region
    $region6: #{tpu_custom_call.1} parent=1 // pred_check
      _
    $region7: #{tpu_custom_call.1} parent=1 // pred_check_branch
      %24 = sbr.rel (0) target = $region9
    $region8: #{tpu_custom_call.1} parent=1 // pred_region
      %s26 = ssub.s32 2048, 2048
      %27 = vsyncadd [#allocation6], %s26
      %s28 = sshll.u32 [#allocation5], 4
      %s29 = int_to_ptr.vmem [resolvable:$true] %s28
      %34 = dma.hbm_to_vmem [thread:$0]  %s1, 2048, %s29, [#allocation6], 128, 128, 8
    $region9: #{tpu_custom_call.1} parent=1 // pred_fallthru
      _
    // Predicated region
    $region10: #{tpu_custom_call.1} parent=1 // pred_check
      _
    $region11: #{tpu_custom_call.1} parent=1 // pred_check_branch
      %36 = sbr.rel (0) target = $region13
    $region12: #{tpu_custom_call.1} parent=1 // pred_region
      _
    $region13: #{tpu_custom_call.1} parent=1 // pred_fallthru
      _
    // Predicated region
    $region14: #{tpu_custom_call.1} parent=1 // pred_check
      _
    $region15: #{tpu_custom_call.1} parent=1 // pred_check_branch
      %38 = sbr.rel (0) target = $region17
    $region16: #{tpu_custom_call.1} parent=1 // pred_region
      %s40 = ssub.s32 2048, 2048
      %41 = vsyncadd [#allocation6], %s40
      %s42 = sshll.u32 [#allocation7], 4
      %s43 = int_to_ptr.vmem [resolvable:$true] %s42
      %48 = dma.hbm_to_vmem [thread:$0]  %s3, 2048, %s43, [#allocation6], 128, 128, 8
    $region17: #{tpu_custom_call.1} parent=1 // pred_fallthru
      _
    // Predicated region
    $region18: #{tpu_custom_call.1} parent=1 // pred_check
      _
    $region19: #{tpu_custom_call.1} parent=1 // pred_check_branch
      %50 = sbr.rel (0) target = $region21
    $region20: #{tpu_custom_call.1} parent=1 // pred_region
      _
    $region21: #{tpu_custom_call.1} parent=1 // pred_fallthru
      _
    // Predicated region
    $region22: #{tpu_custom_call.1} parent=1 // pred_check
      _
    $region23: #{tpu_custom_call.1} parent=1 // pred_check_branch
      %52 = sbr.rel (0) target = $region25
    $region24: #{tpu_custom_call.1} parent=1 // pred_region
      %53 = dma.done [#allocation3], 128
    $region25: #{tpu_custom_call.1} parent=1 // pred_fallthru
      _
    // Predicated region
    $region26: #{tpu_custom_call.1} parent=1 // pred_check
      _
    $region27: #{tpu_custom_call.1} parent=1 // pred_check_branch
      %55 = sbr.rel (0) target = $region29
    $region28: #{tpu_custom_call.1} parent=1 // pred_region
      %56 = dma.done [#allocation6], 2048
    $region29: #{tpu_custom_call.1} parent=1 // pred_fallthru
      _
    // Predicated region
    $region30: #{tpu_custom_call.1} parent=1 // pred_check
      _
    $region31: #{tpu_custom_call.1} parent=1 // pred_check_branch
      %58 = sbr.rel (0) target = $region33
    $region32: #{tpu_custom_call.1} parent=1 // pred_region
      %59 = dma.done [#allocation6], 2048
    $region33: #{tpu_custom_call.1} parent=1 // pred_fallthru
      _
    %v60 = vld [vmem:[#allocation2] sm:$0xff]
    %v61 = vld [vmem:[#allocation5] sm:$0xff]
    %v62 = vld [vmem:[#allocation5 + $0x8] sm:$0xff]
    %v63 = vld [vmem:[#allocation5 + $0x10] sm:$0xff]
    %v64 = vld [vmem:[#allocation5 + $0x18] sm:$0xff]
    %v65 = vld [vmem:[#allocation5 + $0x20] sm:$0xff]
    %v66 = vld [vmem:[#allocation5 + $0x28] sm:$0xff]
    %v67 = vld [vmem:[#allocation5 + $0x30] sm:$0xff]
    %v68 = vld [vmem:[#allocation5 + $0x38] sm:$0xff]
    %v69 = vld [vmem:[#allocation5 + $0x40] sm:$0xff]
    %v70 = vld [vmem:[#allocation5 + $0x48] sm:$0xff]
    %v71 = vld [vmem:[#allocation5 + $0x50] sm:$0xff]
    %v72 = vld [vmem:[#allocation5 + $0x58] sm:$0xff]
    %v73 = vld [vmem:[#allocation5 + $0x60] sm:$0xff]
    %v74 = vld [vmem:[#allocation5 + $0x68] sm:$0xff]
    %v75 = vld [vmem:[#allocation5 + $0x70] sm:$0xff]
    %v76 = vld [vmem:[#allocation5 + $0x78] sm:$0xff]
    %v77 = vld [vmem:[%s2] sm:$0x1]
    %v79 = vlaneseq
    %v80 = vshrl.u32 %v79, 7
    %v81 = vsub.s32 0, %v80
    %v82 = vrot.slane %v77, %v81
    %84 = vmatprep.subr.mxu0 0.0
    %85 = vmatpush1.msra.mxu0 %v61
    %86 = vmatprep.subr.mxu0 0.0
    %87 = vmatpush1.msra.mxu0 %v62
    %88 = vmatprep.subr.mxu0 0.0
    %89 = vmatpush1.msra.mxu0 %v63
    %90 = vmatprep.subr.mxu0 0.0
    %91 = vmatpush1.msra.mxu0 %v64
    %92 = vmatprep.subr.mxu0 0.0
    %93 = vmatpush1.msra.mxu0 %v65
    %94 = vmatprep.subr.mxu0 0.0
    %95 = vmatpush1.msra.mxu0 %v66
    %96 = vmatprep.subr.mxu0 0.0
    %97 = vmatpush1.msra.mxu0 %v67
    %98 = vmatprep.subr.mxu0 0.0
    %99 = vmatpush1.msra.mxu0 %v68
    %100 = vmatprep.subr.mxu0 0.0
    %101 = vmatpush1.msra.mxu0 %v69
    %102 = vmatprep.subr.mxu0 0.0
    %103 = vmatpush1.msra.mxu0 %v70
    %104 = vmatprep.subr.mxu0 0.0
    %105 = vmatpush1.msra.mxu0 %v71
    %106 = vmatprep.subr.mxu0 0.0
    %107 = vmatpush1.msra.mxu0 %v72
    %108 = vmatprep.subr.mxu0 0.0
    %109 = vmatpush1.msra.mxu0 %v73
    %110 = vmatprep.subr.mxu0 0.0
    %111 = vmatpush1.msra.mxu0 %v74
    %112 = vmatprep.subr.mxu0 0.0
    %113 = vmatpush1.msra.mxu0 %v75
    %114 = vmatprep.subr.mxu0 0.0
    %115 = vmatpush1.msra.mxu0 %v76
    %116 = vmatprep.subr.mxu0 0.0
    %117 = vmatpush1.msra.mxu0 0.0
    %118 = vmatprep.subr.mxu0 0.0
    %119 = vmatpush1.msra.mxu0 0.0
    %120 = vmatprep.subr.mxu0 0.0
    %121 = vmatpush1.msra.mxu0 0.0
    %122 = vmatprep.subr.mxu0 0.0
    %123 = vmatpush1.msra.mxu0 0.0
    %124 = vmatprep.subr.mxu0 0.0
    %125 = vmatpush1.msra.mxu0 0.0
    %126 = vmatprep.subr.mxu0 0.0
    %127 = vmatpush1.msra.mxu0 0.0
    %128 = vmatprep.subr.mxu0 0.0
    %129 = vmatpush1.msra.mxu0 0.0
    %130 = vmatprep.subr.mxu0 0.0
    %131 = vmatpush1.msra.mxu0 0.0
    %132 = vmatprep.subr.mxu0 0.0
    %133 = vmatpush1.msra.mxu0 0.0
    %134 = vmatprep.subr.mxu0 0.0
    %135 = vmatpush1.msra.mxu0 0.0
    %136 = vmatprep.subr.mxu0 0.0
    %137 = vmatpush1.msra.mxu0 0.0
    %138 = vmatprep.subr.mxu0 0.0
    %139 = vmatpush1.msra.mxu0 0.0
    %140 = vmatprep.subr.mxu0 0.0
    %141 = vmatpush1.msra.mxu0 0.0
    %142 = vmatprep.subr.mxu0 0.0
    %143 = vmatpush1.msra.mxu0 0.0
    %144 = vmatprep.subr.mxu0 0.0
    %145 = vmatpush1.msra.mxu0 0.0
    %146 = vmatprep.subr.mxu0 0.0
    %147 = vmatpush1.msra.mxu0 0.0
    %148 = vmatprep.mubr.f32.mxu0 0.0
    %149 = vmatmul.mubr.f32.gmra.mrb[0].mxu0 %v60
    %v150 = vpop.f32.mrb[0].mxu0
    %v151 = vadd.f32 %v82, %v150
    %v152 = vpop.f32.mrb[0].mxu0
    %153 = vdwg.mxu0
    %v154 = vtanh.pop %v151
    %v155 = vld [vmem:[#allocation7] sm:$0xff]
    %v156 = vld [vmem:[#allocation7 + $0x8] sm:$0xff]
    %v157 = vld [vmem:[#allocation7 + $0x10] sm:$0xff]
    %v158 = vld [vmem:[#allocation7 + $0x18] sm:$0xff]
    %v159 = vld [vmem:[#allocation7 + $0x20] sm:$0xff]
    %v160 = vld [vmem:[#allocation7 + $0x28] sm:$0xff]
    %v161 = vld [vmem:[#allocation7 + $0x30] sm:$0xff]
    %v162 = vld [vmem:[#allocation7 + $0x38] sm:$0xff]
    %v163 = vld [vmem:[#allocation7 + $0x40] sm:$0xff]
    %v164 = vld [vmem:[#allocation7 + $0x48] sm:$0xff]
    %v165 = vld [vmem:[#allocation7 + $0x50] sm:$0xff]
    %v166 = vld [vmem:[#allocation7 + $0x58] sm:$0xff]
    %v167 = vld [vmem:[#allocation7 + $0x60] sm:$0xff]
    %v168 = vld [vmem:[#allocation7 + $0x68] sm:$0xff]
    %v169 = vld [vmem:[#allocation7 + $0x70] sm:$0xff]
    %v170 = vld [vmem:[#allocation7 + $0x78] sm:$0xff]
    %v171 = vld [vmem:[%s4] sm:$0x1]
    %v173 = vlaneseq
    %v174 = vshrl.u32 %v173, 7
    %v175 = vsub.s32 0, %v174
    %v176 = vrot.slane %v171, %v175
    %178 = vmatprep.subr.mxu0 0.0
    %179 = vmatpush1.msra.mxu0 %v155
    %180 = vmatprep.subr.mxu0 0.0
    %181 = vmatpush1.msra.mxu0 %v156
    %182 = vmatprep.subr.mxu0 0.0
    %183 = vmatpush1.msra.mxu0 %v157
    %184 = vmatprep.subr.mxu0 0.0
    %185 = vmatpush1.msra.mxu0 %v158
    %186 = vmatprep.subr.mxu0 0.0
    %187 = vmatpush1.msra.mxu0 %v159
    %188 = vmatprep.subr.mxu0 0.0
    %189 = vmatpush1.msra.mxu0 %v160
    %190 = vmatprep.subr.mxu0 0.0
    %191 = vmatpush1.msra.mxu0 %v161
    %192 = vmatprep.subr.mxu0 0.0
    %193 = vmatpush1.msra.mxu0 %v162
    %194 = vmatprep.subr.mxu0 0.0
    %195 = vmatpush1.msra.mxu0 %v163
    %196 = vmatprep.subr.mxu0 0.0
    %197 = vmatpush1.msra.mxu0 %v164
    %198 = vmatprep.subr.mxu0 0.0
    %199 = vmatpush1.msra.mxu0 %v165
    %200 = vmatprep.subr.mxu0 0.0
    %201 = vmatpush1.msra.mxu0 %v166
    %202 = vmatprep.subr.mxu0 0.0
    %203 = vmatpush1.msra.mxu0 %v167
    %204 = vmatprep.subr.mxu0 0.0
    %205 = vmatpush1.msra.mxu0 %v168
    %206 = vmatprep.subr.mxu0 0.0
    %207 = vmatpush1.msra.mxu0 %v169
    %208 = vmatprep.subr.mxu0 0.0
    %209 = vmatpush1.msra.mxu0 %v170
    %210 = vmatprep.subr.mxu0 0.0
    %211 = vmatpush1.msra.mxu0 0.0
    %212 = vmatprep.subr.mxu0 0.0
    %213 = vmatpush1.msra.mxu0 0.0
    %214 = vmatprep.subr.mxu0 0.0
    %215 = vmatpush1.msra.mxu0 0.0
    %216 = vmatprep.subr.mxu0 0.0
    %217 = vmatpush1.msra.mxu0 0.0
    %218 = vmatprep.subr.mxu0 0.0
    %219 = vmatpush1.msra.mxu0 0.0
    %220 = vmatprep.subr.mxu0 0.0
    %221 = vmatpush1.msra.mxu0 0.0
    %222 = vmatprep.subr.mxu0 0.0
    %223 = vmatpush1.msra.mxu0 0.0
    %224 = vmatprep.subr.mxu0 0.0
    %225 = vmatpush1.msra.mxu0 0.0
    %226 = vmatprep.subr.mxu0 0.0
    %227 = vmatpush1.msra.mxu0 0.0
    %228 = vmatprep.subr.mxu0 0.0
    %229 = vmatpush1.msra.mxu0 0.0
    %230 = vmatprep.subr.mxu0 0.0
    %231 = vmatpush1.msra.mxu0 0.0
    %232 = vmatprep.subr.mxu0 0.0
    %233 = vmatpush1.msra.mxu0 0.0
    %234 = vmatprep.subr.mxu0 0.0
    %235 = vmatpush1.msra.mxu0 0.0
    %236 = vmatprep.subr.mxu0 0.0
    %237 = vmatpush1.msra.mxu0 0.0
    %238 = vmatprep.subr.mxu0 0.0
    %239 = vmatpush1.msra.mxu0 0.0
    %240 = vmatprep.subr.mxu0 0.0
    %241 = vmatpush1.msra.mxu0 0.0
    %242 = vmatprep.mubr.f32.mxu0 0.0
    %243 = vmatmul.mubr.f32.gmra.mrb[0].mxu0 %v154
    %v244 = vpop.f32.mrb[0].mxu0
    %v245 = vadd.f32 %v176, %v244
    %v246 = vpop.f32.mrb[0].mxu0
    %247 = vdwg.mxu0
    %248 = vst [vmem:[#allocation8] sm:$0xff] %v245
    // Predicated region
    $region34: #{tpu_custom_call.1} parent=1 // pred_check
      _
    $region35: #{tpu_custom_call.1} parent=1 // pred_check_branch
      %250 = sbr.rel (0) target = $region37
    $region36: #{tpu_custom_call.1} parent=1 // pred_region
      %s252 = ssub.s32 128, 128
      %253 = vsyncadd [#allocation4], %s252
      %s255 = sshll.u32 [#allocation8], 4
      %s256 = int_to_ptr.vmem [resolvable:$true] %s255
      %258 = dma.vmem_to_hbm [thread:$0]  %s256, 128, %s5, [#allocation4]
    $region37: #{tpu_custom_call.1} parent=1 // pred_fallthru
      _
    // Predicated region
    $region38: #{tpu_custom_call.1} parent=1 // pred_check
      _
    $region39: #{tpu_custom_call.1} parent=1 // pred_check_branch
      %260 = sbr.rel (0) target = $region41
    $region40: #{tpu_custom_call.1} parent=1 // pred_region
      %261 = dma.done [#allocation4], 128
    $region41: #{tpu_custom_call.1} parent=1 // pred_fallthru
      _
    %262 = vsyncpa [#allocation3], 1
    %263 = vsyncpa [#allocation6], 1
    %264 = vsyncpa [#allocation4], 1

</llo_original>
